<compile_context>
chip_gen: v7x
topology: tpu7x:2x2x1
jax: 0.10.0
libtpu: 0.0.40
codegen_flags: <defaults>
</compile_context>

<pallas_src>
import jax
import jax.numpy as jnp
from jax.experimental import pallas as pl
from jax.experimental.pallas import tpu as pltpu

ACTION_SIZE = 214
DISCARD_SIZE = 18
NOBLE_SIZE = 10
AUX_SIZE = 90 + 25          # 115
INPUT_SIZE = 401

PACKED_HEAD = 256           # 214 + 18 + 10 + memory_size, padded to lane-dense 256
MEM_START = ACTION_SIZE + DISCARD_SIZE + NOBLE_SIZE   # 242
MAX_BLOCK_B = 256           # batch rows per grid step at large batch


def _round_up(x, m):
    return (x + m - 1) // m * m


# ---------------- fused Pallas kernel (the whole forward pass) ----------------

def make_fused_kernel(n_hidden, mem_start, mem_size):
    """Kernel refs: aug, (w_i, b_i) * n_hidden, w_heads, b_heads, out."""

    def kernel(*refs):
        aug_ref = refs[0]
        out_ref = refs[-1]

        h = aug_ref[...]                                   # bf16 (Bb, K)
        idx = 1
        for _ in range(n_hidden):
            w_ref, b_ref = refs[idx], refs[idx + 1]
            idx += 2
            z = jnp.dot(h, w_ref[...],
                        preferred_element_type=jnp.float32) + b_ref[...]
            # ELU(alpha=1).  exp(min(z,0)) - 1 avoids inf on the discarded
            # positive branch (expm1-equivalent away from 0).
            h = jnp.where(z > 0.0, z, jnp.exp(jnp.minimum(z, 0.0)) - 1.0)
            h = h.astype(w_ref.dtype)                      # back to bf16 for MXU

        # All four heads as ONE lane-dense 256-wide matmul.
        wh_ref, bh_ref = refs[idx], refs[idx + 1]
        packed = jnp.dot(h, wh_ref[...],
                         preferred_element_type=jnp.float32) + bh_ref[...]

        # tanh only on the memory columns of the packed output.
        col = jax.lax.broadcasted_iota(jnp.int32, packed.shape, dimension=1)
        is_mem = (col >= mem_start) & (col < mem_start + mem_size)
        out_ref[...] = jnp.where(is_mem, jnp.tanh(packed), packed)

    return kernel


def fused_forward(aug_bf16, hidden_params, w_heads, b_heads, mem_start, mem_size):
    """aug_bf16: (Bp, K) bf16, Bp a multiple of 8 (and of the block size)."""
    Bp, K = aug_bf16.shape
    block_b = Bp if Bp <= MAX_BLOCK_B else MAX_BLOCK_B
    assert Bp % block_b == 0
    grid = (Bp // block_b,)

    flat_params = []
    in_specs = [pl.BlockSpec((block_b, K), lambda i: (i, 0))]
    flops = 0
    transcendentals = 0
    bytes_accessed = aug_bf16.size * aug_bf16.dtype.itemsize

    prev = K
    for w, b in hidden_params:
        flat_params += [w, b]
        in_specs += [pl.BlockSpec(w.shape, lambda i: (0, 0)),
                     pl.BlockSpec(b.shape, lambda i: (0, 0))]
        flops += 2 * Bp * prev * w.shape[1]
        transcendentals += Bp * w.shape[1]
        bytes_accessed += w.size * w.dtype.itemsize + b.size * b.dtype.itemsize
        prev = w.shape[1]

    flat_params += [w_heads, b_heads]
    in_specs += [pl.BlockSpec(w_heads.shape, lambda i: (0, 0)),
                 pl.BlockSpec(b_heads.shape, lambda i: (0, 0))]
    flops += 2 * Bp * prev * PACKED_HEAD
    transcendentals += Bp * PACKED_HEAD                    # tanh
    bytes_accessed += (w_heads.size * w_heads.dtype.itemsize
                       + b_heads.size * b_heads.dtype.itemsize
                       + Bp * PACKED_HEAD * 4)

    kernel = make_fused_kernel(len(hidden_params), mem_start, mem_size)

    return pl.pallas_call(
        kernel,
        out_shape=jax.ShapeDtypeStruct((Bp, PACKED_HEAD), jnp.float32),
        grid=grid,
        in_specs=in_specs,
        out_specs=pl.BlockSpec((block_b, PACKED_HEAD), lambda i: (i, 0)),
        compiler_params=pltpu.CompilerParams(
            dimension_semantics=("parallel",),
            vmem_limit_bytes=32 * 1024 * 1024),
        cost_estimate=pl.CostEstimate(
            flops=int(flops),
            transcendentals=int(transcendentals),
            bytes_accessed=int(bytes_accessed)),
    )(aug_bf16, *flat_params)


# ---------------- parameter init (deterministic, xavier_uniform) ----------------

def _xavier_uniform(key, fan_in, fan_out):
    bound = jnp.sqrt(6.0 / (fan_in + fan_out))
    return jax.random.uniform(key, (fan_in, fan_out), jnp.float32, -bound, bound)


def _bias_init(key, fan_in, fan_out):
    # nn.Linear default bias init: U(-1/sqrt(fan_in), 1/sqrt(fan_in)); kept (1, out).
    bound = 1.0 / jnp.sqrt(jnp.float32(fan_in))
    return jax.random.uniform(key, (1, fan_out), jnp.float32, -bound, bound)


class DenseNetPallas:
    def __init__(self, key, layer_sizes=(256,), memory_size=4):
        self.memory_size = memory_size
        self.layer_sizes = tuple(layer_sizes)
        self.mem_start = MEM_START
        assert MEM_START + memory_size <= PACKED_HEAD

        s = INPUT_SIZE + memory_size + AUX_SIZE            # 520 by default
        self.hidden = []
        for t in self.layer_sizes:
            key, kw, kb = jax.random.split(key, 3)
            w = _xavier_uniform(kw, s, t).astype(jnp.bfloat16)   # bf16 weights
            b = _bias_init(kb, s, t)                             # f32 bias
            self.hidden.append((w, b))
            s = t

        # Per-head xavier init (matching per-layer fan_out), then pack into one
        # lane-dense (s, 256) matrix: [action | discard | noble | memory | pad].
        key, k0, k1, k2, k3 = jax.random.split(key, 5)

        def head(k, out):
            kw, kb = jax.random.split(k)
            return _xavier_uniform(kw, s, out), _bias_init(kb, s, out)

        wa, ba = head(k0, ACTION_SIZE)
        wd, bd = head(k1, DISCARD_SIZE)
        wn, bn = head(k2, NOBLE_SIZE)
        wm, bm = head(k3, memory_size)

        used = MEM_START + memory_size
        pad = PACKED_HEAD - used
        w_heads = jnp.concatenate(
            [wa, wd, wn, wm, jnp.zeros((s, pad), jnp.float32)], axis=1)
        b_heads = jnp.concatenate(
            [ba, bd, bn, bm, jnp.zeros((1, pad), jnp.float32)], axis=1)
        self.w_heads = w_heads.astype(jnp.bfloat16)
        self.b_heads = b_heads                              # f32 bias

    # ----- fused Pallas forward -----
    def forward(self, inp, aux, memory=None):
        B = inp.shape[0]
        if memory is None:
            memory = jnp.zeros((B, self.memory_size), jnp.float32)
        aug = jnp.concatenate(
            (inp.astype(jnp.float32), aux.astype(jnp.float32),
             memory.astype(jnp.float32)), axis=1)

        # Pad batch to a multiple of 8 (f32 sublane); to MAX_BLOCK_B if large.
        Bp = max(_round_up(B, 8), 8)
        if Bp > MAX_BLOCK_B:
            Bp = _round_up(Bp, MAX_BLOCK_B)
        if Bp != B:
            aug = jnp.pad(aug, ((0, Bp - B), (0, 0)))

        packed = fused_forward(aug.astype(jnp.bfloat16), self.hidden,
                               self.w_heads, self.b_heads,
                               self.mem_start, self.memory_size)
        packed = packed[:B]
        action = packed[:, :ACTION_SIZE]
        discard = packed[:, ACTION_SIZE:ACTION_SIZE + DISCARD_SIZE]
        noble = packed[:, ACTION_SIZE + DISCARD_SIZE:MEM_START]
        new_mem = packed[:, self.mem_start:self.mem_start + self.memory_size]
        return action, discard, noble, new_mem

    # ----- plain-JAX reference with identical numerics (bf16 in, f32 acc) -----
    def forward_ref(self, inp, aux, memory=None):
        B = inp.shape[0]
        if memory is None:
            memory = jnp.zeros((B, self.memory_size), jnp.float32)
        aug = jnp.concatenate(
            (inp.astype(jnp.float32), aux.astype(jnp.float32),
             memory.astype(jnp.float32)), axis=1)
        h = aug.astype(jnp.bfloat16)
        for w, b in self.hidden:
            z = jnp.dot(h, w, preferred_element_type=jnp.float32) + b
            h = jnp.where(z > 0.0, z, jnp.exp(jnp.minimum(z, 0.0)) - 1.0)
            h = h.astype(jnp.bfloat16)
        packed = jnp.dot(h, self.w_heads,
                         preferred_element_type=jnp.float32) + self.b_heads
        action = packed[:, :ACTION_SIZE]
        discard = packed[:, ACTION_SIZE:ACTION_SIZE + DISCARD_SIZE]
        noble = packed[:, ACTION_SIZE + DISCARD_SIZE:MEM_START]
        new_mem = jnp.tanh(
            packed[:, self.mem_start:self.mem_start + self.memory_size])
        return action, discard, noble, new_mem


if __name__ == "__main__":
    key = jax.random.PRNGKey(0)
    k_model, k_in, k_aux, k_mem = jax.random.split(key, 4)

    batch = 2
    memory_size = 4
    model = DenseNetPallas(k_model, layer_sizes=(256,), memory_size=memory_size)

    # Deterministic synthetic inputs matching DenseNet.forward's signature.
    x = jax.random.uniform(k_in, (batch, INPUT_SIZE), jnp.float32)
    aux = jax.random.bernoulli(k_aux, 0.5, (batch, AUX_SIZE)).astype(jnp.float32)
    mem = jax.random.uniform(k_mem, (batch, memory_size), jnp.float32, -1.0, 1.0)

    action, discard, noble, new_mem = model.forward(x, aux, mem)
    jax.block_until_ready((action, discard, noble, new_mem))

    # Sanity-check against the pure-JAX reference.
    ra, rd, rn, rm = model.forward_ref(x, aux, mem)
    assert action.shape == (batch, ACTION_SIZE)
    assert discard.shape == (batch, DISCARD_SIZE)
    assert noble.shape == (batch, NOBLE_SIZE)
    assert new_mem.shape == (batch, memory_size)
    assert jnp.allclose(action, ra, atol=2e-3, rtol=2e-3)
    assert jnp.allclose(discard, rd, atol=2e-3, rtol=2e-3)
    assert jnp.allclose(noble, rn, atol=2e-3, rtol=2e-3)
    assert jnp.allclose(new_mem, rm, atol=2e-3, rtol=2e-3)

    print("KERNEL_OK")
</pallas_src>

<mosaic_0001>
module attributes {stable_mosaic.version = 11 : i64} {
  func.func @kernel(%arg0: i32, %arg1: memref<8x520xbf16, #tpu.memory_space<vmem>>, %arg2: memref<520x256xbf16, #tpu.memory_space<vmem>>, %arg3: memref<1x256xf32, #tpu.memory_space<vmem>>, %arg4: memref<256x256xbf16, #tpu.memory_space<vmem>>, %arg5: memref<1x256xf32, #tpu.memory_space<vmem>>, %arg6: memref<8x256xf32, #tpu.memory_space<vmem>>) attributes {dimension_semantics = [#tpu.dimension_semantics<parallel>], iteration_bounds = array<i64: 1>, scalar_prefetch = 0 : i64, scratch_operands = 0 : i64, tpu.core_type = #tpu.core_type<tc>, window_params = [{transform_indices = @transform_0, window_bounds = array<i64: 8, 520>}, {pipeline_mode = #tpu.pipeline_mode<synchronous>, transform_indices = @transform_1, window_bounds = array<i64: 520, 256>}, {pipeline_mode = #tpu.pipeline_mode<synchronous>, transform_indices = @transform_2, window_bounds = array<i64: 1, 256>}, {pipeline_mode = #tpu.pipeline_mode<synchronous>, transform_indices = @transform_3, window_bounds = array<i64: 256, 256>}, {pipeline_mode = #tpu.pipeline_mode<synchronous>, transform_indices = @transform_4, window_bounds = array<i64: 1, 256>}, {transform_indices = @transform_5, window_bounds = array<i64: 8, 256>}]} {
    %c0 = arith.constant 0 : index
    %c0_0 = arith.constant 0 : index
    %0 = vector.load %arg1[%c0, %c0_0] : memref<8x520xbf16, #tpu.memory_space<vmem>>, vector<8x520xbf16>
    %c0_1 = arith.constant 0 : index
    %c0_2 = arith.constant 0 : index
    %1 = vector.load %arg2[%c0_1, %c0_2] : memref<520x256xbf16, #tpu.memory_space<vmem>>, vector<520x256xbf16>
    %cst = arith.constant dense<0.000000e+00> : vector<8x256xf32>
    %2 = tpu.matmul %0, %1, %cst {dimension_numbers = #tpu.dot_dimension_numbers<[1], [0], [0], [1], [0, 0, 1, 1], [], []>} : vector<8x520xbf16>, vector<520x256xbf16>, vector<8x256xf32> -> vector<8x256xf32>
    %c0_3 = arith.constant 0 : index
    %c0_4 = arith.constant 0 : index
    %3 = vector.load %arg3[%c0_3, %c0_4] : memref<1x256xf32, #tpu.memory_space<vmem>>, vector<1x256xf32>
    %4 = vector.broadcast %3 : vector<1x256xf32> to vector<8x256xf32>
    %5 = arith.addf %2, %4 : vector<8x256xf32>
    %cst_5 = arith.constant 0.000000e+00 : f32
    %6 = vector.broadcast %cst_5 : f32 to vector<8x256xf32>
    %7 = arith.cmpf ogt, %5, %6 : vector<8x256xf32>
    %cst_6 = arith.constant 0.000000e+00 : f32
    %8 = vector.broadcast %cst_6 : f32 to vector<8x256xf32>
    %9 = arith.minimumf %5, %8 : vector<8x256xf32>
    %10 = math.exp %9 : vector<8x256xf32>
    %cst_7 = arith.constant 1.000000e+00 : f32
    %11 = vector.broadcast %cst_7 : f32 to vector<8x256xf32>
    %12 = arith.subf %10, %11 : vector<8x256xf32>
    %13 = arith.select %7, %5, %12 : vector<8x256xi1>, vector<8x256xf32>
    %14 = arith.truncf %13 : vector<8x256xf32> to vector<8x256xbf16>
    %c0_8 = arith.constant 0 : index
    %c0_9 = arith.constant 0 : index
    %15 = vector.load %arg4[%c0_8, %c0_9] : memref<256x256xbf16, #tpu.memory_space<vmem>>, vector<256x256xbf16>
    %cst_10 = arith.constant dense<0.000000e+00> : vector<8x256xf32>
    %16 = tpu.matmul %14, %15, %cst_10 {dimension_numbers = #tpu.dot_dimension_numbers<[1], [0], [0], [1], [0, 0, 1, 1], [], []>} : vector<8x256xbf16>, vector<256x256xbf16>, vector<8x256xf32> -> vector<8x256xf32>
    %c0_11 = arith.constant 0 : index
    %c0_12 = arith.constant 0 : index
    %17 = vector.load %arg5[%c0_11, %c0_12] : memref<1x256xf32, #tpu.memory_space<vmem>>, vector<1x256xf32>
    %18 = vector.broadcast %17 : vector<1x256xf32> to vector<8x256xf32>
    %19 = arith.addf %16, %18 : vector<8x256xf32>
    %20 = tpu.iota {dimensions = array<i32: 1>} : vector<8x256xi32>
    %c242_i32 = arith.constant 242 : i32
    %21 = vector.broadcast %c242_i32 : i32 to vector<8x256xi32>
    %22 = arith.cmpi sge, %20, %21 : vector<8x256xi32>
    %c246_i32 = arith.constant 246 : i32
    %23 = vector.broadcast %c246_i32 : i32 to vector<8x256xi32>
    %24 = arith.cmpi slt, %20, %23 : vector<8x256xi32>
    %25 = arith.andi %22, %24 : vector<8x256xi1>
    %26 = math.tanh %19 : vector<8x256xf32>
    %27 = arith.select %25, %26, %19 : vector<8x256xi1>, vector<8x256xf32>
    %c0_13 = arith.constant 0 : index
    %c0_14 = arith.constant 0 : index
    %28 = vector.load %arg6[%c0_13, %c0_14] : memref<8x256xf32, #tpu.memory_space<vmem>>, vector<8x256xf32>
    tpu.vector_store %arg6[%c0_13, %c0_14], %27 {strides = array<i32>} : memref<8x256xf32, #tpu.memory_space<vmem>>, vector<8x256xf32>,
    return
  }
  func.func @transform_0(%arg0: i32) -> (i32, i32) {
    %c0_i32 = arith.constant 0 : i32
    %c0_i32_0 = arith.constant 0 : i32
    return %arg0, %c0_i32 : i32, i32
  }
  func.func @transform_1(%arg0: i32) -> (i32, i32) {
    %c0_i32 = arith.constant 0 : i32
    %c0_i32_0 = arith.constant 0 : i32
    %c0_i32_1 = arith.constant 0 : i32
    return %c0_i32, %c0_i32_0 : i32, i32
  }
  func.func @transform_2(%arg0: i32) -> (i32, i32) {
    %c0_i32 = arith.constant 0 : i32
    %c0_i32_0 = arith.constant 0 : i32
    %c0_i32_1 = arith.constant 0 : i32
    return %c0_i32, %c0_i32_0 : i32, i32
  }
  func.func @transform_3(%arg0: i32) -> (i32, i32) {
    %c0_i32 = arith.constant 0 : i32
    %c0_i32_0 = arith.constant 0 : i32
    %c0_i32_1 = arith.constant 0 : i32
    return %c0_i32, %c0_i32_0 : i32, i32
  }
  func.func @transform_4(%arg0: i32) -> (i32, i32) {
    %c0_i32 = arith.constant 0 : i32
    %c0_i32_0 = arith.constant 0 : i32
    %c0_i32_1 = arith.constant 0 : i32
    return %c0_i32, %c0_i32_0 : i32, i32
  }
  func.func @transform_5(%arg0: i32) -> (i32, i32) {
    %c0_i32 = arith.constant 0 : i32
    %c0_i32_0 = arith.constant 0 : i32
    return %arg0, %c0_i32 : i32, i32
  }
}

</mosaic_0001>

<llo_original>
// kernel: tpu_custom_call.1
$region0: #{tpu_custom_call.1}
  #allocation0 [shape = 'u32[]', space=smem, size = 0x4, offset = 0x4, fixed_abs, tag = 'smem constant byte address 0x4 - core index']
  #allocation1 [shape = 'u32[144,128]{1,0:T(1,128)}', space=vmem, size = 0x12000, scoped, tag = 'internal scratch']
  %s0 = inlined_call_operand.hbm [shape: bf16[8,520], index: 0, kind: input, shape index: {}]
  %s1 = inlined_call_operand.hbm [shape: bf16[520,256], index: 1, kind: input, shape index: {}]
  %s2 = inlined_call_operand.vmem [shape: f32[1,256], index: 2, kind: input, shape index: {}]
  %s3 = inlined_call_operand.hbm [shape: bf16[256,256], index: 3, kind: input, shape index: {}]
  %s4 = inlined_call_operand.vmem [shape: f32[1,256], index: 4, kind: input, shape index: {}]
  %s5 = inlined_call_operand.hbm [shape: f32[8,256], index: 5, kind: output, shape index: {}]
  %s6 = sld [smem:[#allocation0]]
  $region42: #{tpu_custom_call.1} parent=0
    _
  %s8 = ssub.s32 1, %s6
  %s9 = scalar_select 0, %s8, %s6
  $region1: #{tpu_custom_call.1} parent=0
    #allocation2 [shape = 'u8[10240]{0}', space=vmem, size = 0x2800, scoped, tag = 'input window, operand 0, single buffered']
    #allocation3 [shape = 's32[1]{0}', space=sflag, size = 0x4, scoped, tag = 'scoped memory for tpu_custom_call.1']
    #allocation4 [shape = 's32[1]{0}', space=sflag, size = 0x4, scoped, tag = 'scoped memory for tpu_custom_call.1']
    #allocation5 [shape = 'u8[266240]{0}', space=vmem, size = 0x41000, scoped, tag = 'input window, operand 1, single buffered']
    #allocation6 [shape = 's32[1]{0}', space=sflag, size = 0x4, scoped, tag = 'scoped memory for tpu_custom_call.1']
    #allocation7 [shape = 'u8[131072]{0}', space=vmem, size = 0x20000, scoped, tag = 'input window, operand 3, single buffered']
    #allocation8 [shape = 'u8[8192]{0}', space=vmem, size = 0x2000, scoped, tag = 'output window, operand 0, single buffered']
    %10 = vsyncpa [#allocation3], 0
    %11 = vsyncpa [#allocation6], 0
    %12 = vsyncpa [#allocation4], 0
    // Predicated region
    $region2: #{tpu_custom_call.1} parent=1 // pred_check
      _
    $region3: #{tpu_custom_call.1} parent=1 // pred_check_branch
      %14 = sbr.rel (0) target = $region5
    $region4: #{tpu_custom_call.1} parent=1 // pred_region
      %s16 = ssub.s32 320, 320
      %17 = vsyncadd [#allocation3], %s16
      %s19 = sshll.u32 [#allocation2], 4
      %s20 = int_to_ptr.vmem [resolvable:$true] %s19
      %22 = dma.hbm_to_vmem [thread:$0]  %s0, 320, %s20, [#allocation3]
    $region5: #{tpu_custom_call.1} parent=1 // pred_fallthru
      _
    // Predicated region
    $region6: #{tpu_custom_call.1} parent=1 // pred_check
      _
    $region7: #{tpu_custom_call.1} parent=1 // pred_check_branch
      %24 = sbr.rel (0) target = $region9
    $region8: #{tpu_custom_call.1} parent=1 // pred_region
      %s26 = ssub.s32 8320, 8320
      %27 = vsyncadd [#allocation6], %s26
      %s28 = sshll.u32 [#allocation5], 4
      %s29 = int_to_ptr.vmem [resolvable:$true] %s28
      %34 = dma.hbm_to_vmem [thread:$0]  %s1, 8320, %s29, [#allocation6], 128, 128, 8
    $region9: #{tpu_custom_call.1} parent=1 // pred_fallthru
      _
    // Predicated region
    $region10: #{tpu_custom_call.1} parent=1 // pred_check
      _
    $region11: #{tpu_custom_call.1} parent=1 // pred_check_branch
      %36 = sbr.rel (0) target = $region13
    $region12: #{tpu_custom_call.1} parent=1 // pred_region
      _
    $region13: #{tpu_custom_call.1} parent=1 // pred_fallthru
      _
    // Predicated region
    $region14: #{tpu_custom_call.1} parent=1 // pred_check
      _
    $region15: #{tpu_custom_call.1} parent=1 // pred_check_branch
      %38 = sbr.rel (0) target = $region17
    $region16: #{tpu_custom_call.1} parent=1 // pred_region
      %s40 = ssub.s32 4096, 4096
      %41 = vsyncadd [#allocation6], %s40
      %s42 = sshll.u32 [#allocation7], 4
      %s43 = int_to_ptr.vmem [resolvable:$true] %s42
      %48 = dma.hbm_to_vmem [thread:$0]  %s3, 4096, %s43, [#allocation6], 128, 128, 8
    $region17: #{tpu_custom_call.1} parent=1 // pred_fallthru
      _
    // Predicated region
    $region18: #{tpu_custom_call.1} parent=1 // pred_check
      _
    $region19: #{tpu_custom_call.1} parent=1 // pred_check_branch
      %50 = sbr.rel (0) target = $region21
    $region20: #{tpu_custom_call.1} parent=1 // pred_region
      _
    $region21: #{tpu_custom_call.1} parent=1 // pred_fallthru
      _
    // Predicated region
    $region22: #{tpu_custom_call.1} parent=1 // pred_check
      _
    $region23: #{tpu_custom_call.1} parent=1 // pred_check_branch
      %52 = sbr.rel (0) target = $region25
    $region24: #{tpu_custom_call.1} parent=1 // pred_region
      %53 = dma.done [#allocation3], 320
    $region25: #{tpu_custom_call.1} parent=1 // pred_fallthru
      _
    // Predicated region
    $region26: #{tpu_custom_call.1} parent=1 // pred_check
      _
    $region27: #{tpu_custom_call.1} parent=1 // pred_check_branch
      %55 = sbr.rel (0) target = $region29
    $region28: #{tpu_custom_call.1} parent=1 // pred_region
      %56 = dma.done [#allocation6], 8320
    $region29: #{tpu_custom_call.1} parent=1 // pred_fallthru
      _
    // Predicated region
    $region30: #{tpu_custom_call.1} parent=1 // pred_check
      _
    $region31: #{tpu_custom_call.1} parent=1 // pred_check_branch
      %58 = sbr.rel (0) target = $region33
    $region32: #{tpu_custom_call.1} parent=1 // pred_region
      %59 = dma.done [#allocation6], 4096
    $region33: #{tpu_custom_call.1} parent=1 // pred_fallthru
      _
    %v61 = vld [vmem:[#allocation2] sm:$0xff]
    %v62 = vld [vmem:[#allocation2 + $0x8] sm:$0xff]
    %v63 = vld [vmem:[#allocation2 + $0x10] sm:$0xf]
    %v64 = vld [vmem:[#allocation5] sm:$0xff]
    %v65 = vld [vmem:[#allocation5 + $0x8] sm:$0xff]
    %v66 = vld [vmem:[#allocation5 + $0x10] sm:$0xff]
    %v67 = vld [vmem:[#allocation5 + $0x18] sm:$0xff]
    %v68 = vld [vmem:[#allocation5 + $0x20] sm:$0xff]
    %v69 = vld [vmem:[#allocation5 + $0x28] sm:$0xff]
    %v70 = vld [vmem:[#allocation5 + $0x30] sm:$0xff]
    %v71 = vld [vmem:[#allocation5 + $0x38] sm:$0xff]
    %v72 = vld [vmem:[#allocation5 + $0x40] sm:$0xff]
    %v73 = vld [vmem:[#allocation5 + $0x48] sm:$0xff]
    %v74 = vld [vmem:[#allocation5 + $0x50] sm:$0xff]
    %v75 = vld [vmem:[#allocation5 + $0x58] sm:$0xff]
    %v76 = vld [vmem:[#allocation5 + $0x60] sm:$0xff]
    %v77 = vld [vmem:[#allocation5 + $0x68] sm:$0xff]
    %v78 = vld [vmem:[#allocation5 + $0x70] sm:$0xff]
    %v79 = vld [vmem:[#allocation5 + $0x78] sm:$0xff]
    %v80 = vld [vmem:[#allocation5 + $0x80] sm:$0xff]
    %v81 = vld [vmem:[#allocation5 + $0x88] sm:$0xff]
    %v82 = vld [vmem:[#allocation5 + $0x90] sm:$0xff]
    %v83 = vld [vmem:[#allocation5 + $0x98] sm:$0xff]
    %v84 = vld [vmem:[#allocation5 + $0xa0] sm:$0xff]
    %v85 = vld [vmem:[#allocation5 + $0xa8] sm:$0xff]
    %v86 = vld [vmem:[#allocation5 + $0xb0] sm:$0xff]
    %v87 = vld [vmem:[#allocation5 + $0xb8] sm:$0xff]
    %v88 = vld [vmem:[#allocation5 + $0xc0] sm:$0xff]
    %v89 = vld [vmem:[#allocation5 + $0xc8] sm:$0xff]
    %v90 = vld [vmem:[#allocation5 + $0xd0] sm:$0xff]
    %v91 = vld [vmem:[#allocation5 + $0xd8] sm:$0xff]
    %v92 = vld [vmem:[#allocation5 + $0xe0] sm:$0xff]
    %v93 = vld [vmem:[#allocation5 + $0xe8] sm:$0xff]
    %v94 = vld [vmem:[#allocation5 + $0xf0] sm:$0xff]
    %v95 = vld [vmem:[#allocation5 + $0xf8] sm:$0xff]
    %v96 = vld [vmem:[#allocation5 + $0x100] sm:$0xff]
    %v97 = vld [vmem:[#allocation5 + $0x108] sm:$0xff]
    %v98 = vld [vmem:[#allocation5 + $0x110] sm:$0xff]
    %v99 = vld [vmem:[#allocation5 + $0x118] sm:$0xff]
    %v100 = vld [vmem:[#allocation5 + $0x120] sm:$0xff]
    %v101 = vld [vmem:[#allocation5 + $0x128] sm:$0xff]
    %v102 = vld [vmem:[#allocation5 + $0x130] sm:$0xff]
    %v103 = vld [vmem:[#allocation5 + $0x138] sm:$0xff]
    %v104 = vld [vmem:[#allocation5 + $0x140] sm:$0xff]
    %v105 = vld [vmem:[#allocation5 + $0x148] sm:$0xff]
    %v106 = vld [vmem:[#allocation5 + $0x150] sm:$0xff]
    %v107 = vld [vmem:[#allocation5 + $0x158] sm:$0xff]
    %v108 = vld [vmem:[#allocation5 + $0x160] sm:$0xff]
    %v109 = vld [vmem:[#allocation5 + $0x168] sm:$0xff]
    %v110 = vld [vmem:[#allocation5 + $0x170] sm:$0xff]
    %v111 = vld [vmem:[#allocation5 + $0x178] sm:$0xff]
    %v112 = vld [vmem:[#allocation5 + $0x180] sm:$0xff]
    %v113 = vld [vmem:[#allocation5 + $0x188] sm:$0xff]
    %v114 = vld [vmem:[#allocation5 + $0x190] sm:$0xff]
    %v115 = vld [vmem:[#allocation5 + $0x198] sm:$0xff]
    %v116 = vld [vmem:[#allocation5 + $0x1a0] sm:$0xff]
    %v117 = vld [vmem:[#allocation5 + $0x1a8] sm:$0xff]
    %v118 = vld [vmem:[#allocation5 + $0x1b0] sm:$0xff]
    %v119 = vld [vmem:[#allocation5 + $0x1b8] sm:$0xff]
    %v120 = vld [vmem:[#allocation5 + $0x1c0] sm:$0xff]
    %v121 = vld [vmem:[#allocation5 + $0x1c8] sm:$0xff]
    %v122 = vld [vmem:[#allocation5 + $0x1d0] sm:$0xff]
    %v123 = vld [vmem:[#allocation5 + $0x1d8] sm:$0xff]
    %v124 = vld [vmem:[#allocation5 + $0x1e0] sm:$0xff]
    %v125 = vld [vmem:[#allocation5 + $0x1e8] sm:$0xff]
    %v126 = vld [vmem:[#allocation5 + $0x1f0] sm:$0xff]
    %v127 = vld [vmem:[#allocation5 + $0x1f8] sm:$0xff]
    %v128 = vld [vmem:[#allocation5 + $0x200] sm:$0xff]
    %v129 = vld [vmem:[%s2] sm:$0x3]
    %v131 = vlaneseq
    %v132 = vshrl.u32 %v131, 7
    %v133 = vsub.s32 0, %v132
    %v134 = vrot.slane %v129, %v133
    %v135 = vlaneseq
    %v136 = vshrl.u32 %v135, 7
    %v137 = vsub.s32 1, %v136
    %v138 = vrot.slane %v129, %v137
    %v144 = vunpack.c.l.b16 %v61
    %v145 = vunpack.c.h.b16 %v61
    %v146 = vunpack.c.l.b16 %v62
    %v147 = vunpack.c.h.b16 %v62
    %v148 = vunpack.c.l.b16 %v63
    %v149 = vpack.c.b16 %v144, %v144
    %v150 = vpack.c.b16 %v145, %v145
    %v151 = vpack.c.b16 %v146, %v146
    %v152 = vpack.c.b16 %v147, %v147
    %v153 = vpack.c.b16 %v148, %v148
    %v223 = vunpack.c.l.b16 %v64
    %v224 = vunpack.c.h.b16 %v64
    %v225 = vunpack.c.l.b16 %v65
    %v226 = vunpack.c.h.b16 %v65
    %v227 = vunpack.c.l.b16 %v66
    %v228 = vunpack.c.h.b16 %v66
    %v229 = vunpack.c.l.b16 %v67
    %v230 = vunpack.c.h.b16 %v67
    %v231 = vunpack.c.l.b16 %v68
    %v232 = vunpack.c.h.b16 %v68
    %v233 = vunpack.c.l.b16 %v69
    %v234 = vunpack.c.h.b16 %v69
    %v235 = vunpack.c.l.b16 %v70
    %v236 = vunpack.c.h.b16 %v70
    %v237 = vunpack.c.l.b16 %v71
    %v238 = vunpack.c.h.b16 %v71
    %v239 = vunpack.c.l.b16 %v72
    %v240 = vunpack.c.h.b16 %v72
    %v241 = vunpack.c.l.b16 %v73
    %v242 = vunpack.c.h.b16 %v73
    %v243 = vunpack.c.l.b16 %v74
    %v244 = vunpack.c.h.b16 %v74
    %v245 = vunpack.c.l.b16 %v75
    %v246 = vunpack.c.h.b16 %v75
    %v247 = vunpack.c.l.b16 %v76
    %v248 = vunpack.c.h.b16 %v76
    %v249 = vunpack.c.l.b16 %v77
    %v250 = vunpack.c.h.b16 %v77
    %v251 = vunpack.c.l.b16 %v78
    %v252 = vunpack.c.h.b16 %v78
    %v253 = vunpack.c.l.b16 %v79
    %v254 = vunpack.c.h.b16 %v79
    %v255 = vunpack.c.l.b16 %v80
    %v256 = vunpack.c.h.b16 %v80
    %v257 = vunpack.c.l.b16 %v81
    %v258 = vunpack.c.h.b16 %v81
    %v259 = vunpack.c.l.b16 %v82
    %v260 = vunpack.c.h.b16 %v82
    %v261 = vunpack.c.l.b16 %v83
    %v262 = vunpack.c.h.b16 %v83
    %v263 = vunpack.c.l.b16 %v84
    %v264 = vunpack.c.h.b16 %v84
    %v265 = vunpack.c.l.b16 %v85
    %v266 = vunpack.c.h.b16 %v85
    %v267 = vunpack.c.l.b16 %v86
    %v268 = vunpack.c.h.b16 %v86
    %v269 = vunpack.c.l.b16 %v87
    %v270 = vunpack.c.h.b16 %v87
    %v271 = vunpack.c.l.b16 %v88
    %v272 = vunpack.c.h.b16 %v88
    %v273 = vunpack.c.l.b16 %v89
    %v274 = vunpack.c.h.b16 %v89
    %v275 = vunpack.c.l.b16 %v90
    %v276 = vunpack.c.h.b16 %v90
    %v277 = vunpack.c.l.b16 %v91
    %v278 = vunpack.c.h.b16 %v91
    %v279 = vunpack.c.l.b16 %v92
    %v280 = vunpack.c.h.b16 %v92
    %v281 = vunpack.c.l.b16 %v93
    %v282 = vunpack.c.h.b16 %v93
    %v283 = vunpack.c.l.b16 %v94
    %v284 = vunpack.c.h.b16 %v94
    %v285 = vunpack.c.l.b16 %v95
    %v286 = vunpack.c.h.b16 %v95
    %v287 = vunpack.c.l.b16 %v96
    %v288 = vunpack.c.h.b16 %v96
    %v289 = vunpack.c.l.b16 %v97
    %v290 = vunpack.c.h.b16 %v97
    %v291 = vunpack.c.l.b16 %v98
    %v292 = vunpack.c.h.b16 %v98
    %v293 = vunpack.c.l.b16 %v99
    %v294 = vunpack.c.h.b16 %v99
    %v295 = vunpack.c.l.b16 %v100
    %v296 = vunpack.c.h.b16 %v100
    %v297 = vunpack.c.l.b16 %v101
    %v298 = vunpack.c.h.b16 %v101
    %v299 = vunpack.c.l.b16 %v102
    %v300 = vunpack.c.h.b16 %v102
    %v301 = vunpack.c.l.b16 %v103
    %v302 = vunpack.c.h.b16 %v103
    %v303 = vunpack.c.l.b16 %v104
    %v304 = vunpack.c.h.b16 %v104
    %v305 = vunpack.c.l.b16 %v105
    %v306 = vunpack.c.h.b16 %v105
    %v307 = vunpack.c.l.b16 %v106
    %v308 = vunpack.c.h.b16 %v106
    %v309 = vunpack.c.l.b16 %v107
    %v310 = vunpack.c.h.b16 %v107
    %v311 = vunpack.c.l.b16 %v108
    %v312 = vunpack.c.h.b16 %v108
    %v313 = vunpack.c.l.b16 %v109
    %v314 = vunpack.c.h.b16 %v109
    %v315 = vunpack.c.l.b16 %v110
    %v316 = vunpack.c.h.b16 %v110
    %v317 = vunpack.c.l.b16 %v111
    %v318 = vunpack.c.h.b16 %v111
    %v319 = vunpack.c.l.b16 %v112
    %v320 = vunpack.c.h.b16 %v112
    %v321 = vunpack.c.l.b16 %v113
    %v322 = vunpack.c.h.b16 %v113
    %v323 = vunpack.c.l.b16 %v114
    %v324 = vunpack.c.h.b16 %v114
    %v325 = vunpack.c.l.b16 %v115
    %v326 = vunpack.c.h.b16 %v115
    %v327 = vunpack.c.l.b16 %v116
    %v328 = vunpack.c.h.b16 %v116
    %v329 = vunpack.c.l.b16 %v117
    %v330 = vunpack.c.h.b16 %v117
    %v331 = vunpack.c.l.b16 %v118
    %v332 = vunpack.c.h.b16 %v118
    %v333 = vunpack.c.l.b16 %v119
    %v334 = vunpack.c.h.b16 %v119
    %v335 = vunpack.c.l.b16 %v120
    %v336 = vunpack.c.h.b16 %v120
    %v337 = vunpack.c.l.b16 %v121
    %v338 = vunpack.c.h.b16 %v121
    %v339 = vunpack.c.l.b16 %v122
    %v340 = vunpack.c.h.b16 %v122
    %v341 = vunpack.c.l.b16 %v123
    %v342 = vunpack.c.h.b16 %v123
    %v343 = vunpack.c.l.b16 %v124
    %v344 = vunpack.c.h.b16 %v124
    %v345 = vunpack.c.l.b16 %v125
    %v346 = vunpack.c.h.b16 %v125
    %v347 = vunpack.c.l.b16 %v126
    %v348 = vunpack.c.h.b16 %v126
    %v349 = vunpack.c.l.b16 %v127
    %v350 = vunpack.c.h.b16 %v127
    %v351 = vunpack.c.l.b16 %v128
    %v352 = vunpack.c.h.b16 %v128
    %v353 = vpack.c.b16 %v225, %v223
    %v354 = vpack.c.b16 %v226, %v224
    %v355 = vpack.c.b16 %v229, %v227
    %v356 = vpack.c.b16 %v230, %v228
    %v357 = vpack.c.b16 %v233, %v231
    %v358 = vpack.c.b16 %v234, %v232
    %v359 = vpack.c.b16 %v237, %v235
    %v360 = vpack.c.b16 %v238, %v236
    %v361 = vpack.c.b16 %v241, %v239
    %v362 = vpack.c.b16 %v242, %v240
    %v363 = vpack.c.b16 %v245, %v243
    %v364 = vpack.c.b16 %v246, %v244
    %v365 = vpack.c.b16 %v249, %v247
    %v366 = vpack.c.b16 %v250, %v248
    %v367 = vpack.c.b16 %v253, %v251
    %v368 = vpack.c.b16 %v254, %v252
    %v369 = vpack.c.b16 %v257, %v255
    %v370 = vpack.c.b16 %v258, %v256
    %v371 = vpack.c.b16 %v261, %v259
    %v372 = vpack.c.b16 %v262, %v260
    %v373 = vpack.c.b16 %v265, %v263
    %v374 = vpack.c.b16 %v266, %v264
    %v375 = vpack.c.b16 %v269, %v267
    %v376 = vpack.c.b16 %v270, %v268
    %v377 = vpack.c.b16 %v273, %v271
    %v378 = vpack.c.b16 %v274, %v272
    %v379 = vpack.c.b16 %v277, %v275
    %v380 = vpack.c.b16 %v278, %v276
    %v381 = vpack.c.b16 %v281, %v279
    %v382 = vpack.c.b16 %v282, %v280
    %v383 = vpack.c.b16 %v285, %v283
    %v384 = vpack.c.b16 %v286, %v284
    %v385 = vpack.c.b16 %v289, %v287
    %v386 = vpack.c.b16 %v290, %v288
    %v387 = vpack.c.b16 %v293, %v291
    %v388 = vpack.c.b16 %v294, %v292
    %v389 = vpack.c.b16 %v297, %v295
    %v390 = vpack.c.b16 %v298, %v296
    %v391 = vpack.c.b16 %v301, %v299
    %v392 = vpack.c.b16 %v302, %v300
    %v393 = vpack.c.b16 %v305, %v303
    %v394 = vpack.c.b16 %v306, %v304
    %v395 = vpack.c.b16 %v309, %v307
    %v396 = vpack.c.b16 %v310, %v308
    %v397 = vpack.c.b16 %v313, %v311
    %v398 = vpack.c.b16 %v314, %v312
    %v399 = vpack.c.b16 %v317, %v315
    %v400 = vpack.c.b16 %v318, %v316
    %v401 = vpack.c.b16 %v321, %v319
    %v402 = vpack.c.b16 %v322, %v320
    %v403 = vpack.c.b16 %v325, %v323
    %v404 = vpack.c.b16 %v326, %v324
    %v405 = vpack.c.b16 %v329, %v327
    %v406 = vpack.c.b16 %v330, %v328
    %v407 = vpack.c.b16 %v333, %v331
    %v408 = vpack.c.b16 %v334, %v332
    %v409 = vpack.c.b16 %v337, %v335
    %v410 = vpack.c.b16 %v338, %v336
    %v411 = vpack.c.b16 %v341, %v339
    %v412 = vpack.c.b16 %v342, %v340
    %v413 = vpack.c.b16 %v345, %v343
    %v414 = vpack.c.b16 %v346, %v344
    %v415 = vpack.c.b16 %v349, %v347
    %v416 = vpack.c.b16 %v350, %v348
    %v417 = vpack.c.b16 %v351, %v351
    %v418 = vpack.c.b16 %v352, %v352
    %vm483 = vcmask 64512
    %v485 = vsel %vm483, %v153, 0
    %vm487 = vcmask 1043456
    %v489 = vsel %vm487, %v417, 0
    %v492 = vsel %vm487, %v418, 0
    %494 = vmatprep.subr.bf16.mxu0 %v354
    %495 = vmatpush1.bf16.msra.mxu0 %v353
    %496 = vmatprep.subr.bf16.mxu0 %v356
    %497 = vmatpush1.bf16.msra.mxu0 %v355
    %498 = vmatprep.subr.bf16.mxu0 %v358
    %499 = vmatpush1.bf16.msra.mxu0 %v357
    %500 = vmatprep.subr.bf16.mxu0 %v360
    %501 = vmatpush1.bf16.msra.mxu0 %v359
    %502 = vmatprep.subr.bf16.mxu0 %v362
    %503 = vmatpush1.bf16.msra.mxu0 %v361
    %504 = vmatprep.subr.bf16.mxu0 %v364
    %505 = vmatpush1.bf16.msra.mxu0 %v363
    %506 = vmatprep.subr.bf16.mxu0 %v366
    %507 = vmatpush1.bf16.msra.mxu0 %v365
    %508 = vmatprep.subr.bf16.mxu0 %v368
    %509 = vmatpush1.bf16.msra.mxu0 %v367
    %510 = vmatprep.subr.bf16.mxu0 %v370
    %511 = vmatpush1.bf16.msra.mxu0 %v369
    %512 = vmatprep.subr.bf16.mxu0 %v372
    %513 = vmatpush1.bf16.msra.mxu0 %v371
    %514 = vmatprep.subr.bf16.mxu0 %v374
    %515 = vmatpush1.bf16.msra.mxu0 %v373
    %516 = vmatprep.subr.bf16.mxu0 %v376
    %517 = vmatpush1.bf16.msra.mxu0 %v375
    %518 = vmatprep.subr.bf16.mxu0 %v378
    %519 = vmatpush1.bf16.msra.mxu0 %v377
    %520 = vmatprep.subr.bf16.mxu0 %v380
    %521 = vmatpush1.bf16.msra.mxu0 %v379
    %522 = vmatprep.subr.bf16.mxu0 %v382
    %523 = vmatpush1.bf16.msra.mxu0 %v381
    %524 = vmatprep.subr.bf16.mxu0 %v384
    %525 = vmatpush1.bf16.msra.mxu0 %v383
    %526 = vmatprep.mubr.bf16.mxu0 %v150
    %527 = vmatmul.mubr.bf16.gmra.mrb[0].mxu0 %v149
    %v528 = vpop.f32.mrb[0].mxu0
    %v529 = vadd.f32 %v134, %v528
    %v530 = vpop.f32.mrb[0].mxu0
    %v531 = vadd.f32 %v138, %v530
    %v532 = vpop.f32.mrb[0].mxu0
    %v533 = vpop.f32.mrb[0].mxu0
    %534 = vdwg.mxu0
    %535 = vmatprep.subr.bf16.mxu0 %v386
    %536 = vmatpush1.bf16.msra.mxu0 %v385
    %537 = vmatprep.subr.bf16.mxu0 %v388
    %538 = vmatpush1.bf16.msra.mxu0 %v387
    %539 = vmatprep.subr.bf16.mxu0 %v390
    %540 = vmatpush1.bf16.msra.mxu0 %v389
    %541 = vmatprep.subr.bf16.mxu0 %v392
    %542 = vmatpush1.bf16.msra.mxu0 %v391
    %543 = vmatprep.subr.bf16.mxu0 %v394
    %544 = vmatpush1.bf16.msra.mxu0 %v393
    %545 = vmatprep.subr.bf16.mxu0 %v396
    %546 = vmatpush1.bf16.msra.mxu0 %v395
    %547 = vmatprep.subr.bf16.mxu0 %v398
    %548 = vmatpush1.bf16.msra.mxu0 %v397
    %549 = vmatprep.subr.bf16.mxu0 %v400
    %550 = vmatpush1.bf16.msra.mxu0 %v399
    %551 = vmatprep.subr.bf16.mxu0 %v402
    %552 = vmatpush1.bf16.msra.mxu0 %v401
    %553 = vmatprep.subr.bf16.mxu0 %v404
    %554 = vmatpush1.bf16.msra.mxu0 %v403
    %555 = vmatprep.subr.bf16.mxu0 %v406
    %556 = vmatpush1.bf16.msra.mxu0 %v405
    %557 = vmatprep.subr.bf16.mxu0 %v408
    %558 = vmatpush1.bf16.msra.mxu0 %v407
    %559 = vmatprep.subr.bf16.mxu0 %v410
    %560 = vmatpush1.bf16.msra.mxu0 %v409
    %561 = vmatprep.subr.bf16.mxu0 %v412
    %562 = vmatpush1.bf16.msra.mxu0 %v411
    %563 = vmatprep.subr.bf16.mxu0 %v414
    %564 = vmatpush1.bf16.msra.mxu0 %v413
    %565 = vmatprep.subr.bf16.mxu0 %v416
    %566 = vmatpush1.bf16.msra.mxu0 %v415
    %567 = vmatprep.mubr.bf16.mxu0 %v152
    %568 = vmatmul.mubr.bf16.gmra.mrb[0].mxu0 %v151
    %v569 = vpop.f32.mrb[0].mxu0
    %v570 = vadd.f32 %v529, %v569
    %v571 = vpop.f32.mrb[0].mxu0
    %v572 = vadd.f32 %v531, %v571
    %v573 = vpop.f32.mrb[0].mxu0
    %v574 = vpop.f32.mrb[0].mxu0
    %575 = vdwg.mxu0
    %576 = vmatprep.subr.bf16.mxu0 %v492
    %577 = vmatpush1.bf16.msra.mxu0 %v489
    %578 = vmatprep.subr.bf16.mxu0 0
    %579 = vmatpush1.bf16.msra.mxu0 0
    %580 = vmatprep.subr.bf16.mxu0 0
    %581 = vmatpush1.bf16.msra.mxu0 0
    %582 = vmatprep.subr.bf16.mxu0 0
    %583 = vmatpush1.bf16.msra.mxu0 0
    %584 = vmatprep.subr.bf16.mxu0 0
    %585 = vmatpush1.bf16.msra.mxu0 0
    %586 = vmatprep.subr.bf16.mxu0 0
    %587 = vmatpush1.bf16.msra.mxu0 0
    %588 = vmatprep.subr.bf16.mxu0 0
    %589 = vmatpush1.bf16.msra.mxu0 0
    %590 = vmatprep.subr.bf16.mxu0 0
    %591 = vmatpush1.bf16.msra.mxu0 0
    %592 = vmatprep.subr.bf16.mxu0 0
    %593 = vmatpush1.bf16.msra.mxu0 0
    %594 = vmatprep.subr.bf16.mxu0 0
    %595 = vmatpush1.bf16.msra.mxu0 0
    %596 = vmatprep.subr.bf16.mxu0 0
    %597 = vmatpush1.bf16.msra.mxu0 0
    %598 = vmatprep.subr.bf16.mxu0 0
    %599 = vmatpush1.bf16.msra.mxu0 0
    %600 = vmatprep.subr.bf16.mxu0 0
    %601 = vmatpush1.bf16.msra.mxu0 0
    %602 = vmatprep.subr.bf16.mxu0 0
    %603 = vmatpush1.bf16.msra.mxu0 0
    %604 = vmatprep.subr.bf16.mxu0 0
    %605 = vmatpush1.bf16.msra.mxu0 0
    %606 = vmatprep.subr.bf16.mxu0 0
    %607 = vmatpush1.bf16.msra.mxu0 0
    %608 = vmatprep.mubr.bf16.mxu0 0
    %609 = vmatmul.mubr.bf16.gmra.mrb[0].mxu0 %v485
    %v610 = vpop.f32.mrb[0].mxu0
    %v611 = vadd.f32 %v570, %v610
    %v612 = vpop.f32.mrb[0].mxu0
    %v613 = vadd.f32 %v572, %v612
    %v614 = vpop.f32.mrb[0].mxu0
    %v615 = vpop.f32.mrb[0].mxu0
    %616 = vdwg.mxu0
    %vm617 = vcmp.gt.f32.partialorder %v611, 0.0
    %vm618 = vcmp.gt.f32.partialorder %v613, 0.0
    %v619 = vmin.f32 %v611, 0.0
    %v620 = vmin.f32 %v613, 0.0
    %v621 = vmul.f32 %v619, 1.442695
    %v622 = vpow.pop %v621
    %v623 = vmul.f32 %v620, 1.442695
    %v624 = vpow.pop %v623
    %v625 = vsub.f32 %v622, 1.0
    %v626 = vsub.f32 %v624, 1.0
    %v627 = vsel %vm617, %v611, %v625
    %v628 = vsel %vm618, %v613, %v626
    %v629 = vpack.c.bf16 %v627, %v627
    %v630 = vpack.c.bf16 %v628, %v628
    %v631 = vld [vmem:[#allocation7] sm:$0xff]
    %v632 = vld [vmem:[#allocation7 + $0x8] sm:$0xff]
    %v633 = vld [vmem:[#allocation7 + $0x10] sm:$0xff]
    %v634 = vld [vmem:[#allocation7 + $0x18] sm:$0xff]
    %v635 = vld [vmem:[#allocation7 + $0x20] sm:$0xff]
    %v636 = vld [vmem:[#allocation7 + $0x28] sm:$0xff]
    %v637 = vld [vmem:[#allocation7 + $0x30] sm:$0xff]
    %v638 = vld [vmem:[#allocation7 + $0x38] sm:$0xff]
    %v639 = vld [vmem:[#allocation7 + $0x40] sm:$0xff]
    %v640 = vld [vmem:[#allocation7 + $0x48] sm:$0xff]
    %v641 = vld [vmem:[#allocation7 + $0x50] sm:$0xff]
    %v642 = vld [vmem:[#allocation7 + $0x58] sm:$0xff]
    %v643 = vld [vmem:[#allocation7 + $0x60] sm:$0xff]
    %v644 = vld [vmem:[#allocation7 + $0x68] sm:$0xff]
    %v645 = vld [vmem:[#allocation7 + $0x70] sm:$0xff]
    %v646 = vld [vmem:[#allocation7 + $0x78] sm:$0xff]
    %v647 = vld [vmem:[#allocation7 + $0x80] sm:$0xff]
    %v648 = vld [vmem:[#allocation7 + $0x88] sm:$0xff]
    %v649 = vld [vmem:[#allocation7 + $0x90] sm:$0xff]
    %v650 = vld [vmem:[#allocation7 + $0x98] sm:$0xff]
    %v651 = vld [vmem:[#allocation7 + $0xa0] sm:$0xff]
    %v652 = vld [vmem:[#allocation7 + $0xa8] sm:$0xff]
    %v653 = vld [vmem:[#allocation7 + $0xb0] sm:$0xff]
    %v654 = vld [vmem:[#allocation7 + $0xb8] sm:$0xff]
    %v655 = vld [vmem:[#allocation7 + $0xc0] sm:$0xff]
    %v656 = vld [vmem:[#allocation7 + $0xc8] sm:$0xff]
    %v657 = vld [vmem:[#allocation7 + $0xd0] sm:$0xff]
    %v658 = vld [vmem:[#allocation7 + $0xd8] sm:$0xff]
    %v659 = vld [vmem:[#allocation7 + $0xe0] sm:$0xff]
    %v660 = vld [vmem:[#allocation7 + $0xe8] sm:$0xff]
    %v661 = vld [vmem:[#allocation7 + $0xf0] sm:$0xff]
    %v662 = vld [vmem:[#allocation7 + $0xf8] sm:$0xff]
    %v663 = vld [vmem:[%s4] sm:$0x3]
    %v665 = vlaneseq
    %v666 = vshrl.u32 %v665, 7
    %v667 = vsub.s32 0, %v666
    %v668 = vrot.slane %v663, %v667
    %v669 = vlaneseq
    %v670 = vshrl.u32 %v669, 7
    %v671 = vsub.s32 1, %v670
    %v672 = vrot.slane %v663, %v671
    %v707 = vunpack.c.l.b16 %v631
    %v708 = vunpack.c.h.b16 %v631
    %v709 = vunpack.c.l.b16 %v632
    %v710 = vunpack.c.h.b16 %v632
    %v711 = vunpack.c.l.b16 %v633
    %v712 = vunpack.c.h.b16 %v633
    %v713 = vunpack.c.l.b16 %v634
    %v714 = vunpack.c.h.b16 %v634
    %v715 = vunpack.c.l.b16 %v635
    %v716 = vunpack.c.h.b16 %v635
    %v717 = vunpack.c.l.b16 %v636
    %v718 = vunpack.c.h.b16 %v636
    %v719 = vunpack.c.l.b16 %v637
    %v720 = vunpack.c.h.b16 %v637
    %v721 = vunpack.c.l.b16 %v638
    %v722 = vunpack.c.h.b16 %v638
    %v723 = vunpack.c.l.b16 %v639
    %v724 = vunpack.c.h.b16 %v639
    %v725 = vunpack.c.l.b16 %v640
    %v726 = vunpack.c.h.b16 %v640
    %v727 = vunpack.c.l.b16 %v641
    %v728 = vunpack.c.h.b16 %v641
    %v729 = vunpack.c.l.b16 %v642
    %v730 = vunpack.c.h.b16 %v642
    %v731 = vunpack.c.l.b16 %v643
    %v732 = vunpack.c.h.b16 %v643
    %v733 = vunpack.c.l.b16 %v644
    %v734 = vunpack.c.h.b16 %v644
    %v735 = vunpack.c.l.b16 %v645
    %v736 = vunpack.c.h.b16 %v645
    %v737 = vunpack.c.l.b16 %v646
    %v738 = vunpack.c.h.b16 %v646
    %v739 = vunpack.c.l.b16 %v647
    %v740 = vunpack.c.h.b16 %v647
    %v741 = vunpack.c.l.b16 %v648
    %v742 = vunpack.c.h.b16 %v648
    %v743 = vunpack.c.l.b16 %v649
    %v744 = vunpack.c.h.b16 %v649
    %v745 = vunpack.c.l.b16 %v650
    %v746 = vunpack.c.h.b16 %v650
    %v747 = vunpack.c.l.b16 %v651
    %v748 = vunpack.c.h.b16 %v651
    %v749 = vunpack.c.l.b16 %v652
    %v750 = vunpack.c.h.b16 %v652
    %v751 = vunpack.c.l.b16 %v653
    %v752 = vunpack.c.h.b16 %v653
    %v753 = vunpack.c.l.b16 %v654
    %v754 = vunpack.c.h.b16 %v654
    %v755 = vunpack.c.l.b16 %v655
    %v756 = vunpack.c.h.b16 %v655
    %v757 = vunpack.c.l.b16 %v656
    %v758 = vunpack.c.h.b16 %v656
    %v759 = vunpack.c.l.b16 %v657
    %v760 = vunpack.c.h.b16 %v657
    %v761 = vunpack.c.l.b16 %v658
    %v762 = vunpack.c.h.b16 %v658
    %v763 = vunpack.c.l.b16 %v659
    %v764 = vunpack.c.h.b16 %v659
    %v765 = vunpack.c.l.b16 %v660
    %v766 = vunpack.c.h.b16 %v660
    %v767 = vunpack.c.l.b16 %v661
    %v768 = vunpack.c.h.b16 %v661
    %v769 = vunpack.c.l.b16 %v662
    %v770 = vunpack.c.h.b16 %v662
    %v771 = vpack.c.b16 %v709, %v707
    %v772 = vpack.c.b16 %v710, %v708
    %v773 = vpack.c.b16 %v713, %v711
    %v774 = vpack.c.b16 %v714, %v712
    %v775 = vpack.c.b16 %v717, %v715
    %v776 = vpack.c.b16 %v718, %v716
    %v777 = vpack.c.b16 %v721, %v719
    %v778 = vpack.c.b16 %v722, %v720
    %v779 = vpack.c.b16 %v725, %v723
    %v780 = vpack.c.b16 %v726, %v724
    %v781 = vpack.c.b16 %v729, %v727
    %v782 = vpack.c.b16 %v730, %v728
    %v783 = vpack.c.b16 %v733, %v731
    %v784 = vpack.c.b16 %v734, %v732
    %v785 = vpack.c.b16 %v737, %v735
    %v786 = vpack.c.b16 %v738, %v736
    %v787 = vpack.c.b16 %v741, %v739
    %v788 = vpack.c.b16 %v742, %v740
    %v789 = vpack.c.b16 %v745, %v743
    %v790 = vpack.c.b16 %v746, %v744
    %v791 = vpack.c.b16 %v749, %v747
    %v792 = vpack.c.b16 %v750, %v748
    %v793 = vpack.c.b16 %v753, %v751
    %v794 = vpack.c.b16 %v754, %v752
    %v795 = vpack.c.b16 %v757, %v755
    %v796 = vpack.c.b16 %v758, %v756
    %v797 = vpack.c.b16 %v761, %v759
    %v798 = vpack.c.b16 %v762, %v760
    %v799 = vpack.c.b16 %v765, %v763
    %v800 = vpack.c.b16 %v766, %v764
    %v801 = vpack.c.b16 %v769, %v767
    %v802 = vpack.c.b16 %v770, %v768
    %835 = vmatprep.subr.bf16.mxu0 %v772
    %836 = vmatpush1.bf16.msra.mxu0 %v771
    %837 = vmatprep.subr.bf16.mxu0 %v774
    %838 = vmatpush1.bf16.msra.mxu0 %v773
    %839 = vmatprep.subr.bf16.mxu0 %v776
    %840 = vmatpush1.bf16.msra.mxu0 %v775
    %841 = vmatprep.subr.bf16.mxu0 %v778
    %842 = vmatpush1.bf16.msra.mxu0 %v777
    %843 = vmatprep.subr.bf16.mxu0 %v780
    %844 = vmatpush1.bf16.msra.mxu0 %v779
    %845 = vmatprep.subr.bf16.mxu0 %v782
    %846 = vmatpush1.bf16.msra.mxu0 %v781
    %847 = vmatprep.subr.bf16.mxu0 %v784
    %848 = vmatpush1.bf16.msra.mxu0 %v783
    %849 = vmatprep.subr.bf16.mxu0 %v786
    %850 = vmatpush1.bf16.msra.mxu0 %v785
    %851 = vmatprep.subr.bf16.mxu0 %v788
    %852 = vmatpush1.bf16.msra.mxu0 %v787
    %853 = vmatprep.subr.bf16.mxu0 %v790
    %854 = vmatpush1.bf16.msra.mxu0 %v789
    %855 = vmatprep.subr.bf16.mxu0 %v792
    %856 = vmatpush1.bf16.msra.mxu0 %v791
    %857 = vmatprep.subr.bf16.mxu0 %v794
    %858 = vmatpush1.bf16.msra.mxu0 %v793
    %859 = vmatprep.subr.bf16.mxu0 %v796
    %860 = vmatpush1.bf16.msra.mxu0 %v795
    %861 = vmatprep.subr.bf16.mxu0 %v798
    %862 = vmatpush1.bf16.msra.mxu0 %v797
    %863 = vmatprep.subr.bf16.mxu0 %v800
    %864 = vmatpush1.bf16.msra.mxu0 %v799
    %865 = vmatprep.subr.bf16.mxu0 %v802
    %866 = vmatpush1.bf16.msra.mxu0 %v801
    %867 = vmatprep.mubr.bf16.mxu0 %v630
    %868 = vmatmul.mubr.bf16.gmra.mrb[0].mxu0 %v629
    %v869 = vpop.f32.mrb[0].mxu0
    %v870 = vadd.f32 %v668, %v869
    %v871 = vpop.f32.mrb[0].mxu0
    %v872 = vadd.f32 %v672, %v871
    %v873 = vpop.f32.mrb[0].mxu0
    %v874 = vpop.f32.mrb[0].mxu0
    %875 = vdwg.mxu0
    %v876 = vlaneseq
    %v877 = vand.u32 %v876, 127
    %v878 = vadd.s32 %v877, 128
    %vm879 = vcmp.ge.s32.totalorder %v877, 242
    %vm880 = vcmp.ge.s32.totalorder %v878, 242
    %vm881 = vcmp.lt.s32.totalorder %v877, 246
    %vm882 = vcmp.lt.s32.totalorder %v878, 246
    %vm883 = vmand %vm879, %vm881
    %vm884 = vmand %vm880, %vm882
    %v885 = vtanh.pop %v870
    %v886 = vtanh.pop %v872
    %v887 = vsel %vm883, %v885, %v870
    %v888 = vsel %vm884, %v886, %v872
    %889 = vst [vmem:[#allocation8] sm:$0xff] %v887
    %890 = vst [vmem:[#allocation8 + $0x8] sm:$0xff] %v888
    // Predicated region
    $region34: #{tpu_custom_call.1} parent=1 // pred_check
      _
    $region35: #{tpu_custom_call.1} parent=1 // pred_check_branch
      %892 = sbr.rel (0) target = $region37
    $region36: #{tpu_custom_call.1} parent=1 // pred_region
      %s894 = ssub.s32 256, 256
      %895 = vsyncadd [#allocation4], %s894
      %s897 = sshll.u32 [#allocation8], 4
      %s898 = int_to_ptr.vmem [resolvable:$true] %s897
      %900 = dma.vmem_to_hbm [thread:$0]  %s898, 256, %s5, [#allocation4]
    $region37: #{tpu_custom_call.1} parent=1 // pred_fallthru
      _
    // Predicated region
    $region38: #{tpu_custom_call.1} parent=1 // pred_check
      _
    $region39: #{tpu_custom_call.1} parent=1 // pred_check_branch
      %902 = sbr.rel (0) target = $region41
    $region40: #{tpu_custom_call.1} parent=1 // pred_region
      %903 = dma.done [#allocation4], 256
    $region41: #{tpu_custom_call.1} parent=1 // pred_fallthru
      _
    %904 = vsyncpa [#allocation3], 1
    %905 = vsyncpa [#allocation6], 1
    %906 = vsyncpa [#allocation4], 1

</llo_original>
